<compile_context>
chip_gen: v6e
topology: v6e:2x2x1
jax: 0.10.0
libtpu: 0.0.40
codegen_flags: <defaults>
</compile_context>

<pallas_src>
import jax
import jax.numpy as jnp
from jax.experimental import pallas as pl
from jax.experimental.pallas import tpu as pltpu

F = 10                 # in/out features of every Linear
N = 10                 # batch size (must be 10 or 1 so `p + seq1(x)` broadcasts, as in PyTorch)
LANES = 128            # lane-dense last dim for weights/output
WC_OFF = 0             # rows [0, 2F)        : fused weight chain Wc, lane-padded
PB_OFF = 24            # rows [24, 24+F)     : p + folded biases (sublane-aligned start)
SLAB_ROWS = 40         # packed param slab rows (multiple of 8)


def toy_kernel(xy_ref, wpb_ref, out_ref):
    """out = xy @ Wc + (p + biases); single MXU pass, lane-dense store."""
    xy = xy_ref[...]                                   # (n, 2F) = [x | y]
    wc = wpb_ref[WC_OFF:WC_OFF + 2 * F, :]             # (2F, 128) fused weights, lane-padded
    pb = wpb_ref[PB_OFF:PB_OFF + F, :]                 # (F, 128)  p + all folded biases
    out_ref[...] = jnp.dot(xy, wc, preferred_element_type=jnp.float32) + pb


def pack_params(params):
    """Parameter-only packing. Run ONCE per parameter update, not per forward call.

    Returns a single lane-dense (SLAB_ROWS, 128) f32 slab containing:
      rows [0, 2F)       : Wc = [ w1a^T @ w1b^T ; w2a^T @ w2b^T ]  (cols 0..F-1)
      rows [PB_OFF, +F)  : p + (b1a @ w1b^T + b1b + b2a @ w2b^T + b2b)  (cols 0..F-1)
    """
    f32 = jnp.float32
    wc = jnp.concatenate(
        [params["w1a"].T @ params["w1b"].T, params["w2a"].T @ params["w2b"].T], axis=0
    ).astype(f32)                                                           # (2F, F)
    bias_row = (params["b1a"] @ params["w1b"].T + params["b1b"]
                + params["b2a"] @ params["w2b"].T + params["b2b"])          # (F,)
    p_plus_bias = (params["p"] + bias_row[None, :]).astype(f32)             # (F, F)

    wpb = jnp.zeros((SLAB_ROWS, LANES), f32)
    wpb = wpb.at[WC_OFF:WC_OFF + 2 * F, :F].set(wc)
    wpb = wpb.at[PB_OFF:PB_OFF + F, :F].set(p_plus_bias)
    return wpb


def toy_model_forward(x, y, wpb, b):
    """x, y: (n, F); wpb: packed param slab from pack_params; b: (1,) buffer.

    Returns (out, b_new) with out = p + seq1(x) + seq2(y), b_new = b + x.sum() + y.sum().
    Output shape is fixed at (F, F): for n == 1 the PyTorch-style broadcast
    `p + seq1(x)` yields a (10, 10) result, matching the reference module.
    """
    n = x.shape[0]
    assert x.shape == (n, F) and y.shape == (n, F)
    assert n in (1, F), "p + seq1(x) only broadcasts for batch == 10 (or 1), as in PyTorch"

    f32 = jnp.float32
    xy = jnp.concatenate([x, y], axis=1).astype(f32)                        # (n, 2F)

    full = lambda shape: pl.BlockSpec(shape, lambda: (0,) * len(shape))

    out_pad = pl.pallas_call(
        toy_kernel,
        out_shape=jax.ShapeDtypeStruct((F, LANES), f32),
        in_specs=[
            full((n, 2 * F)),           # xy  = [x | y]            (per-call)
            full((SLAB_ROWS, LANES)),   # packed Wc + p_plus_bias  (precomputed)
        ],
        out_specs=full((F, LANES)),
        cost_estimate=pl.CostEstimate(
            flops=2 * n * (2 * F) * LANES,
            transcendentals=0,
            bytes_accessed=4 * (n * 2 * F + SLAB_ROWS * LANES + F * LANES),
        ),
        compiler_params=pltpu.CompilerParams(vmem_limit_bytes=2 * 1024 * 1024),
    )(xy, wpb)

    out = out_pad[:, :F]                                                    # (F, F)

    # Buffer update done as a plain XLA reduce in the wrapper (per perf review): it removes
    # two tiny DMAs, a full 2-D XLU reduce and a masked (1,1) store from the kernel.
    b_new = b + jnp.sum(xy)
    return out, b_new


def init_params(key):
    """Deterministic synthetic init matching nn.Linear(10,10) x4 + p = randn(10,10)."""
    ks = jax.random.split(key, 9)
    bound = 1.0 / jnp.sqrt(F)  # PyTorch Linear default init bound
    u = lambda k, shape: jax.random.uniform(k, shape, jnp.float32, -bound, bound)
    return {
        "w1a": u(ks[0], (F, F)), "b1a": u(ks[1], (F,)),
        "w1b": u(ks[2], (F, F)), "b1b": u(ks[3], (F,)),
        "w2a": u(ks[4], (F, F)), "b2a": u(ks[5], (F,)),
        "w2b": u(ks[6], (F, F)), "b2b": u(ks[7], (F,)),
        "p":   jax.random.normal(ks[8], (F, F), jnp.float32),
    }


def reference_forward(x, y, params, b):
    lin = lambda h, w, bias: h @ w.T + bias
    h1 = lin(lin(x, params["w1a"], params["b1a"]), params["w1b"], params["b1b"])
    h2 = lin(lin(y, params["w2a"], params["b2a"]), params["w2b"], params["b2b"])
    return params["p"] + h1 + h2, b + x.sum() + y.sum()


if __name__ == "__main__":
    key = jax.random.PRNGKey(0)
    kx, ky, kp = jax.random.split(key, 3)

    x = jax.random.normal(kx, (N, F), jnp.float32)
    y = jax.random.normal(ky, (N, F), jnp.float32)
    params = init_params(kp)
    b = jnp.zeros((1,), jnp.float32)  # self.b buffer

    wpb = pack_params(params)  # hoisted: once per parameter update, not per call

    out, b_new = toy_model_forward(x, y, wpb, b)
    jax.block_until_ready((out, b_new))

    out_ref, b_ref = reference_forward(x, y, params, b)
    assert out.shape == (F, F) and b_new.shape == (1,)
    assert jnp.allclose(out, out_ref, atol=1e-4, rtol=1e-4)
    assert jnp.allclose(b_new, b_ref, atol=1e-4, rtol=1e-4)

    print("KERNEL_OK")
</pallas_src>

<mosaic_0001>
module attributes {stable_mosaic.version = 11 : i64} {
  func.func @toy_kernel(%arg0: memref<10x20xf32, #tpu.memory_space<vmem>>, %arg1: memref<40x128xf32, #tpu.memory_space<vmem>>, %arg2: memref<10x128xf32, #tpu.memory_space<vmem>>) attributes {dimension_semantics = [], scalar_prefetch = 0 : i64, scratch_operands = 0 : i64, tpu.core_type = #tpu.core_type<tc>} {
    %c0 = arith.constant 0 : index
    %c0_0 = arith.constant 0 : index
    %0 = vector.load %arg0[%c0, %c0_0] : memref<10x20xf32, #tpu.memory_space<vmem>>, vector<10x20xf32>
    %c0_1 = arith.constant 0 : index
    %c0_2 = arith.constant 0 : index
    %1 = vector.load %arg1[%c0_1, %c0_2] : memref<40x128xf32, #tpu.memory_space<vmem>>, vector<20x128xf32>
    %c24 = arith.constant 24 : index
    %c0_3 = arith.constant 0 : index
    %2 = vector.load %arg1[%c24, %c0_3] : memref<40x128xf32, #tpu.memory_space<vmem>>, vector<10x128xf32>
    %cst = arith.constant dense<0.000000e+00> : vector<10x128xf32>
    %3 = tpu.matmul %0, %1, %cst {dimension_numbers = #tpu.dot_dimension_numbers<[1], [0], [0], [1], [0, 0, 1, 1], [], []>} : vector<10x20xf32>, vector<20x128xf32>, vector<10x128xf32> -> vector<10x128xf32>
    %4 = arith.addf %3, %2 : vector<10x128xf32>
    %c0_4 = arith.constant 0 : index
    %c0_5 = arith.constant 0 : index
    %5 = vector.load %arg2[%c0_4, %c0_5] : memref<10x128xf32, #tpu.memory_space<vmem>>, vector<10x128xf32>
    tpu.vector_store %arg2[%c0_4, %c0_5], %4 {strides = array<i32>} : memref<10x128xf32, #tpu.memory_space<vmem>>, vector<10x128xf32>,
    return
  }
}

</mosaic_0001>

<llo_original>
// kernel: tpu_custom_call.1
$region0: #{tpu_custom_call.1}
  #allocation0 [shape = 'u32[]', space=smem, size = 0x4, offset = 0x4, fixed_abs, tag = 'smem constant byte address 0x4 - core index']
  #allocation1 [shape = 'u32[144,128]{1,0:T(1,128)}', space=vmem, size = 0x12000, scoped, tag = 'internal scratch']
  %s0 = inlined_call_operand.hbm [shape: f32[10,20], index: 0, kind: input, shape index: {}]
  %s1 = inlined_call_operand.hbm [shape: f32[40,128], index: 1, kind: input, shape index: {}]
  %s2 = inlined_call_operand.hbm [shape: f32[10,128], index: 2, kind: output, shape index: {}]
  %s3 = sld [smem:[#allocation0]]
  $region26: #{tpu_custom_call.1} parent=0
    _
  %s5 = ssub.s32 1, %s3
  %s6 = scalar_select 0, %s5, %s3
  $region1: #{tpu_custom_call.1} parent=0
    #allocation2 [shape = 'u8[8192]{0}', space=vmem, size = 0x2000, scoped, tag = 'input window, operand 0, single buffered']
    #allocation3 [shape = 's32[1]{0}', space=sflag, size = 0x4, scoped, tag = 'scoped memory for tpu_custom_call.1']
    #allocation4 [shape = 's32[1]{0}', space=sflag, size = 0x4, scoped, tag = 'scoped memory for tpu_custom_call.1']
    #allocation5 [shape = 'u8[20480]{0}', space=vmem, size = 0x5000, scoped, tag = 'input window, operand 1, single buffered']
    #allocation6 [shape = 's32[1]{0}', space=sflag, size = 0x4, scoped, tag = 'scoped memory for tpu_custom_call.1']
    #allocation7 [shape = 'u8[8192]{0}', space=vmem, size = 0x2000, scoped, tag = 'output window, operand 0, single buffered']
    %7 = vsyncpa [#allocation3], 0
    %8 = vsyncpa [#allocation6], 0
    %9 = vsyncpa [#allocation4], 0
    // Predicated region
    $region2: #{tpu_custom_call.1} parent=1 // pred_check
      _
    $region3: #{tpu_custom_call.1} parent=1 // pred_check_branch
      %11 = sbr.rel (0) target = $region5
    $region4: #{tpu_custom_call.1} parent=1 // pred_region
      %s13 = ssub.s32 256, 256
      %14 = vsyncadd [#allocation3], %s13
      %s15 = sshll.u32 [#allocation2], 4
      %s16 = int_to_ptr.vmem [resolvable:$true] %s15
      %21 = dma.hbm_to_vmem [thread:$0]  %s0, 256, %s16, [#allocation3], 128, 128, 8
    $region5: #{tpu_custom_call.1} parent=1 // pred_fallthru
      _
    // Predicated region
    $region6: #{tpu_custom_call.1} parent=1 // pred_check
      _
    $region7: #{tpu_custom_call.1} parent=1 // pred_check_branch
      %23 = sbr.rel (0) target = $region9
    $region8: #{tpu_custom_call.1} parent=1 // pred_region
      %s25 = ssub.s32 640, 640
      %26 = vsyncadd [#allocation6], %s25
      %s27 = sshll.u32 [#allocation5], 4
      %s28 = int_to_ptr.vmem [resolvable:$true] %s27
      %33 = dma.hbm_to_vmem [thread:$0]  %s1, 640, %s28, [#allocation6], 128, 128, 8
    $region9: #{tpu_custom_call.1} parent=1 // pred_fallthru
      _
    // Predicated region
    $region10: #{tpu_custom_call.1} parent=1 // pred_check
      _
    $region11: #{tpu_custom_call.1} parent=1 // pred_check_branch
      %35 = sbr.rel (0) target = $region13
    $region12: #{tpu_custom_call.1} parent=1 // pred_region
      %36 = dma.done [#allocation3], 256
    $region13: #{tpu_custom_call.1} parent=1 // pred_fallthru
      _
    // Predicated region
    $region14: #{tpu_custom_call.1} parent=1 // pred_check
      _
    $region15: #{tpu_custom_call.1} parent=1 // pred_check_branch
      %38 = sbr.rel (0) target = $region17
    $region16: #{tpu_custom_call.1} parent=1 // pred_region
      %39 = dma.done [#allocation6], 640
    $region17: #{tpu_custom_call.1} parent=1 // pred_fallthru
      _
    %v40 = vld [vmem:[#allocation2] sm:$0xff]
    %v41 = vld [vmem:[#allocation2 + $0x8] sm:$0x3]
    %v42 = vld [vmem:[#allocation5] sm:$0xff]
    %v43 = vld [vmem:[#allocation5 + $0x8] sm:$0xff]
    %v44 = vld [vmem:[#allocation5 + $0x10] sm:$0xf]
    %v45 = vld [vmem:[#allocation5 + $0x18] sm:$0xff]
    %v46 = vld [vmem:[#allocation5 + $0x20] sm:$0x3]
    %vm47 = vcmask 162816
    %v49 = vsel %vm47, %v40, 0
    %v52 = vsel %vm47, %v41, 0
    %vm54 = vcmask 1043456
    %v56 = vsel %vm54, %v44, 0
    %58 = vmatprep.subr.mxu0 0.0
    %59 = vmatpush1.msra.mxu0 0.0
    %60 = vmatprep.subr.mxu0 0.0
    %61 = vmatpush1.msra.mxu0 0.0
    %62 = vmatprep.subr.mxu0 0.0
    %63 = vmatpush1.msra.mxu0 0.0
    %64 = vmatprep.subr.mxu0 0.0
    %65 = vmatpush1.msra.mxu0 0.0
    %66 = vmatprep.subr.mxu0 0.0
    %67 = vmatpush1.msra.mxu0 0.0
    %68 = vmatprep.subr.mxu0 0.0
    %69 = vmatpush1.msra.mxu0 0.0
    %70 = vmatprep.subr.mxu0 0.0
    %71 = vmatpush1.msra.mxu0 0.0
    %72 = vmatprep.subr.mxu0 0.0
    %73 = vmatpush1.msra.mxu0 0.0
    %74 = vmatprep.subr.mxu0 0.0
    %75 = vmatpush1.msra.mxu0 0.0
    %76 = vmatprep.subr.mxu0 0.0
    %77 = vmatpush1.msra.mxu0 0.0
    %78 = vmatprep.subr.mxu0 0.0
    %79 = vmatpush1.msra.mxu0 0.0
    %80 = vmatprep.subr.mxu0 0.0
    %81 = vmatpush1.msra.mxu0 0.0
    %82 = vmatprep.subr.mxu0 0.0
    %83 = vmatpush1.msra.mxu0 0.0
    %84 = vmatprep.subr.mxu0 0.0
    %85 = vmatpush1.msra.mxu0 %v56
    %86 = vmatprep.subr.mxu0 0.0
    %87 = vmatpush1.msra.mxu0 %v43
    %88 = vmatprep.subr.mxu0 0.0
    %89 = vmatpush1.msra.mxu0 %v42
    %90 = vmatprep.subr.mxu0 0.0
    %91 = vmatpush2.msra.mxu0 0.0
    %92 = vmatprep.subr.mxu0 0.0
    %93 = vmatpush2.msra.mxu0 0.0
    %94 = vmatprep.subr.mxu0 0.0
    %95 = vmatpush2.msra.mxu0 0.0
    %96 = vmatprep.subr.mxu0 0.0
    %97 = vmatpush2.msra.mxu0 0.0
    %98 = vmatprep.subr.mxu0 0.0
    %99 = vmatpush2.msra.mxu0 0.0
    %100 = vmatprep.subr.mxu0 0.0
    %101 = vmatpush2.msra.mxu0 0.0
    %102 = vmatprep.subr.mxu0 0.0
    %103 = vmatpush2.msra.mxu0 0.0
    %104 = vmatprep.subr.mxu0 0.0
    %105 = vmatpush2.msra.mxu0 0.0
    %106 = vmatprep.subr.mxu0 0.0
    %107 = vmatpush2.msra.mxu0 0.0
    %108 = vmatprep.subr.mxu0 0.0
    %109 = vmatpush2.msra.mxu0 0.0
    %110 = vmatprep.subr.mxu0 0.0
    %111 = vmatpush2.msra.mxu0 0.0
    %112 = vmatprep.subr.mxu0 0.0
    %113 = vmatpush2.msra.mxu0 0.0
    %114 = vmatprep.subr.mxu0 0.0
    %115 = vmatpush2.msra.mxu0 0.0
    %116 = vmatprep.subr.mxu0 0.0
    %117 = vmatpush2.msra.mxu0 0.0
    %118 = vmatprep.subr.mxu0 0.0
    %119 = vmatpush2.msra.mxu0 0.0
    %120 = vmatprep.subr.mxu0 0.0
    %121 = vmatpush2.msra.mxu0 0.0
    %122 = vmatprep.mubr.f32.mxu0 0.0
    %123 = vmatmul.mubr.f32.gmra.mxu0 %v49
    %v124 = vpop.f32.mrf.mxu0
    %v125 = vadd.f32 %v45, %v124
    %v126 = vpop.f32.mrf.mxu0
    %127 = vmatprep.mubr.f32.mxu0 0.0
    %128 = vmatmul.mubr.f32.gmra.mxu0 %v52
    %v129 = vpop.f32.mrf.mxu0
    %v130 = vadd.f32 %v46, %v129
    %v131 = vpop.f32.mrf.mxu0
    %132 = vdwg.mxu0
    %133 = vst [vmem:[#allocation7] sm:$0xff] %v125
    %134 = vst [vmem:[#allocation7 + $0x8] sm:$0x3] %v130
    // Predicated region
    $region18: #{tpu_custom_call.1} parent=1 // pred_check
      _
    $region19: #{tpu_custom_call.1} parent=1 // pred_check_branch
      %136 = sbr.rel (0) target = $region21
    $region20: #{tpu_custom_call.1} parent=1 // pred_region
      %s138 = ssub.s32 256, 256
      %139 = vsyncadd [#allocation4], %s138
      %s140 = sshll.u32 [#allocation7], 4
      %s141 = int_to_ptr.vmem [resolvable:$true] %s140
      %146 = dma.vmem_to_hbm [thread:$0]  %s141, 256, %s2, [#allocation4], 128, 128, 8
    $region21: #{tpu_custom_call.1} parent=1 // pred_fallthru
      _
    // Predicated region
    $region22: #{tpu_custom_call.1} parent=1 // pred_check
      _
    $region23: #{tpu_custom_call.1} parent=1 // pred_check_branch
      %148 = sbr.rel (0) target = $region25
    $region24: #{tpu_custom_call.1} parent=1 // pred_region
      %149 = dma.done [#allocation4], 256
    $region25: #{tpu_custom_call.1} parent=1 // pred_fallthru
      _
    %150 = vsyncpa [#allocation3], 1
    %151 = vsyncpa [#allocation6], 1
    %152 = vsyncpa [#allocation4], 1

</llo_original>
